<compile_context>
chip_gen: v7x
topology: tpu7x:2x2x1
jax: 0.10.0
libtpu: 0.0.40
codegen_flags: <defaults>
</compile_context>

<pallas_src>
import functools

import jax
import jax.numpy as jnp
import numpy as np
from jax.experimental import pallas as pl
from jax.experimental.pallas import tpu as pltpu


def _round_up(n, m):
    return ((n + m - 1) // m) * m


def _ttt_mlp_kernel(x_ref, w1_ref, b1_ref, w2_ref, b2_ref, w3_ref, b3_ref,
                    o_ref, xpad_ref):
    d0 = x_ref.shape[1]        # 9 real input features
    n_out = o_ref.shape[1]     # 9 real output features

    # --- pad x to 128 lanes, VMEM-only (x is unpadded in HBM) --------------
    # Full zero + partial overwrite every step: cheap (~2 stores per 8 rows)
    # and megacore-safe (a program_id==0-only init would never run on core 1
    # when the grid is sharded across TensorCores).
    xpad_ref[...] = jnp.zeros_like(xpad_ref)
    xpad_ref[:, :d0] = x_ref[...]

    # --- layer 1: Linear(9, 256) + tanh (MXU, K zero-padded to 128) --------
    h1 = jnp.tanh(
        jnp.dot(xpad_ref[...], w1_ref[...], preferred_element_type=jnp.float32)
        + b1_ref[...]
    )

    # --- layer 2: Linear(256, 128) + tanh (MXU) -----------------------------
    h2 = jnp.tanh(
        jnp.dot(h1, w2_ref[...], preferred_element_type=jnp.float32)
        + b2_ref[...]
    )

    # --- layer 3: Linear(128, 9) (N zero-padded to 128 for the MXU, then
    #     sliced back to the real 9 columns before the narrow HBM store) -----
    y = (jnp.dot(h2, w3_ref[...], preferred_element_type=jnp.float32)
         + b3_ref[...])
    o_ref[...] = y[:, :n_out].astype(o_ref.dtype)


def prepare_params(w1, b1, w2, b2, w3, b3):
    """One-time parameter prep (outside the per-call path).

    Zero-pads w1's contraction dim (9 -> 128) and the 9-wide output layer's
    columns (9 -> 128); reshapes biases to (1, D)."""
    d0, d1 = w1.shape            # (9, 256)
    d2, d3 = w3.shape            # (128, 9)
    kp = _round_up(d0, 128)      # 128
    np_ = _round_up(d3, 128)     # 128
    w1_p = jnp.zeros((kp, d1), jnp.float32).at[:d0, :].set(w1.astype(jnp.float32))
    w3_p = jnp.zeros((d2, np_), jnp.float32).at[:, :d3].set(w3.astype(jnp.float32))
    b3_p = jnp.zeros((1, np_), jnp.float32).at[0, :d3].set(b3.astype(jnp.float32))
    return (
        w1_p,
        b1.reshape(1, -1).astype(jnp.float32),
        w2.astype(jnp.float32),
        b2.reshape(1, -1).astype(jnp.float32),
        w3_p,
        b3_p,
    )


@functools.partial(jax.jit, static_argnames=("n_out", "block_b"))
def ttt_forward(x, params, n_out=9, block_b=2048):
    """x: [B, 9] float32.  params from prepare_params().  Returns [B, 9]."""
    w1p, b1, w2, b2, w3p, b3p = params
    B, D0 = x.shape
    Kp = w1p.shape[0]          # 128 (padded from 9)
    D1 = w1p.shape[1]          # 256
    D2 = w2.shape[1]           # 128
    D3p = w3p.shape[1]         # 128 (padded from 9)

    # Batch tile: as large as possible for low per-step overhead, but capped
    # at ~B/2 so there are >=2 grid steps (both v7x TensorCores get work).
    half = (B + 1) // 2
    tb = max(8, min(block_b, _round_up(half, 8)))
    grid = (pl.cdiv(B, tb),)

    # Weights/biases: constant block index -> fetched once, VMEM-resident.
    resident = lambda shape: pl.BlockSpec(shape, lambda i: (0, 0))

    # Explicit scoped-VMEM budget sized from the actual footprint
    # (double-buffered x/out tiles + x-pad scratch + h1/h2/y intermediates
    #  + double-buffered weights), with margin; stays well under v7x's 64 MiB.
    weight_bytes = 4 * (Kp * D1 + D1 + D1 * D2 + D2 + D2 * D3p + D3p)
    tile_bytes = 4 * tb * (2 * D0 + 2 * n_out + Kp + D1 + D2 + D3p)
    vmem_limit = int(min(48 << 20, max(32 << 20, 2 * (tile_bytes + 2 * weight_bytes))))

    return pl.pallas_call(
        _ttt_mlp_kernel,
        out_shape=jax.ShapeDtypeStruct((B, n_out), jnp.float32),
        grid=grid,
        in_specs=[
            pl.BlockSpec((tb, D0), lambda i: (i, 0)),   # x: batch-tiled, 9 lanes in HBM
            resident((Kp, D1)),                          # w1 padded (128, 256)
            resident((1, D1)),                           # b1
            resident((D1, D2)),                          # w2 (256, 128)
            resident((1, D2)),                           # b2
            resident((D2, D3p)),                         # w3 padded (128, 128)
            resident((1, D3p)),                          # b3 padded
        ],
        out_specs=pl.BlockSpec((tb, n_out), lambda i: (i, 0)),  # unpadded (B, 9) output
        scratch_shapes=[pltpu.VMEM((tb, Kp), jnp.float32)],     # x pad buffer (VMEM only)
        compiler_params=pltpu.CompilerParams(
            dimension_semantics=("parallel",),           # megacore split on v7x
            vmem_limit_bytes=vmem_limit,
        ),
    )(x.astype(jnp.float32), w1p, b1, w2, b2, w3p, b3p)


def init_params(key):
    """Deterministic init mimicking PyTorch nn.Linear default U(-1/sqrt(fan_in), +).

    Weights returned in [in, out] layout."""
    dims = [(9, 256), (256, 128), (128, 9)]
    params = []
    for fan_in, fan_out in dims:
        key, kw, kb = jax.random.split(key, 3)
        bound = float(1.0 / np.sqrt(fan_in))
        w = jax.random.uniform(kw, (fan_in, fan_out), jnp.float32, -bound, bound)
        b = jax.random.uniform(kb, (fan_out,), jnp.float32, -bound, bound)
        params += [w, b]
    return params


# TODO(synk): training pieces of the module (Adam optimizer, MSELoss, unused
# sigmoid) are not part of forward() and are not implemented here.

if __name__ == "__main__":
    key = jax.random.PRNGKey(0)
    kx, kx2, kp = jax.random.split(key, 3)

    w1, b1, w2, b2, w3, b3 = init_params(kp)
    params = prepare_params(w1, b1, w2, b2, w3, b3)

    # exact-f32 reference on the host (same math as the PyTorch forward)
    w1n, b1n = np.asarray(w1), np.asarray(b1)
    w2n, b2n = np.asarray(w2), np.asarray(b2)
    w3n, b3n = np.asarray(w3), np.asarray(b3)

    def ref_fn(x):
        xn = np.asarray(x, np.float32)
        r = np.tanh(xn @ w1n + b1n)
        r = np.tanh(r @ w2n + b2n)
        return r @ w3n + b3n

    # small smoke test (batch = 8, single grid step)
    x_small = jax.random.normal(kx, (8, 9), jnp.float32)
    out_small = jax.block_until_ready(ttt_forward(x_small, params))
    assert out_small.shape == (8, 9)
    np.testing.assert_allclose(np.asarray(out_small), ref_fn(x_small),
                               atol=1e-3, rtol=1e-3)

    # larger ragged batch, small explicit tile (4 grid steps, partial last tile)
    x_big = jax.random.normal(kx2, (1000, 9), jnp.float32)
    out_big = jax.block_until_ready(ttt_forward(x_big, params, block_b=256))
    assert out_big.shape == (1000, 9)
    np.testing.assert_allclose(np.asarray(out_big), ref_fn(x_big),
                               atol=1e-3, rtol=1e-3)

    # default tiling path: tb capped to ~B/2 -> 2 grid steps, ragged last tile
    out_big2 = jax.block_until_ready(ttt_forward(x_big, params))
    assert out_big2.shape == (1000, 9)
    np.testing.assert_allclose(np.asarray(out_big2), ref_fn(x_big),
                               atol=1e-3, rtol=1e-3)

    print("KERNEL_OK")
</pallas_src>

<mosaic_0001>
module attributes {stable_mosaic.version = 11 : i64} {
  func.func @_ttt_mlp_kernel(%arg0: i32, %arg1: memref<8x9xf32, #tpu.memory_space<vmem>>, %arg2: memref<128x256xf32, #tpu.memory_space<vmem>>, %arg3: memref<1x256xf32, #tpu.memory_space<vmem>>, %arg4: memref<256x128xf32, #tpu.memory_space<vmem>>, %arg5: memref<1x128xf32, #tpu.memory_space<vmem>>, %arg6: memref<128x128xf32, #tpu.memory_space<vmem>>, %arg7: memref<1x128xf32, #tpu.memory_space<vmem>>, %arg8: memref<8x9xf32, #tpu.memory_space<vmem>>, %arg9: memref<8x128xf32, #tpu.memory_space<vmem>>) attributes {dimension_semantics = [#tpu.dimension_semantics<parallel>], iteration_bounds = array<i64: 1>, scalar_prefetch = 0 : i64, scratch_operands = 1 : i64, tpu.core_type = #tpu.core_type<tc>, window_params = [{transform_indices = @transform_0, window_bounds = array<i64: 8, 9>}, {pipeline_mode = #tpu.pipeline_mode<synchronous>, transform_indices = @transform_1, window_bounds = array<i64: 128, 256>}, {pipeline_mode = #tpu.pipeline_mode<synchronous>, transform_indices = @transform_2, window_bounds = array<i64: 1, 256>}, {pipeline_mode = #tpu.pipeline_mode<synchronous>, transform_indices = @transform_3, window_bounds = array<i64: 256, 128>}, {pipeline_mode = #tpu.pipeline_mode<synchronous>, transform_indices = @transform_4, window_bounds = array<i64: 1, 128>}, {pipeline_mode = #tpu.pipeline_mode<synchronous>, transform_indices = @transform_5, window_bounds = array<i64: 128, 128>}, {pipeline_mode = #tpu.pipeline_mode<synchronous>, transform_indices = @transform_6, window_bounds = array<i64: 1, 128>}, {transform_indices = @transform_7, window_bounds = array<i64: 8, 9>}]} {
    %cst = arith.constant 0.000000e+00 : f32
    %0 = vector.broadcast %cst : f32 to vector<8x128xf32>
    %c0 = arith.constant 0 : index
    %c0_0 = arith.constant 0 : index
    %1 = vector.load %arg9[%c0, %c0_0] : memref<8x128xf32, #tpu.memory_space<vmem>>, vector<8x128xf32>
    tpu.vector_store %arg9[%c0, %c0_0], %0 {strides = array<i32>} : memref<8x128xf32, #tpu.memory_space<vmem>>, vector<8x128xf32>,
    %c0_1 = arith.constant 0 : index
    %c0_2 = arith.constant 0 : index
    %2 = vector.load %arg1[%c0_1, %c0_2] : memref<8x9xf32, #tpu.memory_space<vmem>>, vector<8x9xf32>
    %c0_3 = arith.constant 0 : index
    %c0_4 = arith.constant 0 : index
    %3 = vector.load %arg9[%c0_3, %c0_4] : memref<8x128xf32, #tpu.memory_space<vmem>>, vector<8x9xf32>
    tpu.vector_store %arg9[%c0_3, %c0_4], %2 {strides = array<i32>} : memref<8x128xf32, #tpu.memory_space<vmem>>, vector<8x9xf32>,
    %c0_5 = arith.constant 0 : index
    %c0_6 = arith.constant 0 : index
    %4 = vector.load %arg9[%c0_5, %c0_6] : memref<8x128xf32, #tpu.memory_space<vmem>>, vector<8x128xf32>
    %c0_7 = arith.constant 0 : index
    %c0_8 = arith.constant 0 : index
    %5 = vector.load %arg2[%c0_7, %c0_8] : memref<128x256xf32, #tpu.memory_space<vmem>>, vector<128x256xf32>
    %cst_9 = arith.constant dense<0.000000e+00> : vector<8x256xf32>
    %6 = tpu.matmul %4, %5, %cst_9 {dimension_numbers = #tpu.dot_dimension_numbers<[1], [0], [0], [1], [0, 0, 1, 1], [], []>} : vector<8x128xf32>, vector<128x256xf32>, vector<8x256xf32> -> vector<8x256xf32>
    %c0_10 = arith.constant 0 : index
    %c0_11 = arith.constant 0 : index
    %7 = vector.load %arg3[%c0_10, %c0_11] : memref<1x256xf32, #tpu.memory_space<vmem>>, vector<1x256xf32>
    %8 = vector.broadcast %7 : vector<1x256xf32> to vector<8x256xf32>
    %9 = arith.addf %6, %8 : vector<8x256xf32>
    %10 = math.tanh %9 : vector<8x256xf32>
    %c0_12 = arith.constant 0 : index
    %c0_13 = arith.constant 0 : index
    %11 = vector.load %arg4[%c0_12, %c0_13] : memref<256x128xf32, #tpu.memory_space<vmem>>, vector<256x128xf32>
    %cst_14 = arith.constant dense<0.000000e+00> : vector<8x128xf32>
    %12 = tpu.matmul %10, %11, %cst_14 {dimension_numbers = #tpu.dot_dimension_numbers<[1], [0], [0], [1], [0, 0, 1, 1], [], []>} : vector<8x256xf32>, vector<256x128xf32>, vector<8x128xf32> -> vector<8x128xf32>
    %c0_15 = arith.constant 0 : index
    %c0_16 = arith.constant 0 : index
    %13 = vector.load %arg5[%c0_15, %c0_16] : memref<1x128xf32, #tpu.memory_space<vmem>>, vector<1x128xf32>
    %14 = vector.broadcast %13 : vector<1x128xf32> to vector<8x128xf32>
    %15 = arith.addf %12, %14 : vector<8x128xf32>
    %16 = math.tanh %15 : vector<8x128xf32>
    %c0_17 = arith.constant 0 : index
    %c0_18 = arith.constant 0 : index
    %17 = vector.load %arg6[%c0_17, %c0_18] : memref<128x128xf32, #tpu.memory_space<vmem>>, vector<128x128xf32>
    %cst_19 = arith.constant dense<0.000000e+00> : vector<8x128xf32>
    %18 = tpu.matmul %16, %17, %cst_19 {dimension_numbers = #tpu.dot_dimension_numbers<[1], [0], [0], [1], [0, 0, 1, 1], [], []>} : vector<8x128xf32>, vector<128x128xf32>, vector<8x128xf32> -> vector<8x128xf32>
    %c0_20 = arith.constant 0 : index
    %c0_21 = arith.constant 0 : index
    %19 = vector.load %arg7[%c0_20, %c0_21] : memref<1x128xf32, #tpu.memory_space<vmem>>, vector<1x128xf32>
    %20 = vector.broadcast %19 : vector<1x128xf32> to vector<8x128xf32>
    %21 = arith.addf %18, %20 : vector<8x128xf32>
    %22 = vector.extract_strided_slice %21 {offsets = [0, 0], sizes = [8, 9], strides = [1, 1]} : vector<8x128xf32> to vector<8x9xf32>
    %c0_22 = arith.constant 0 : index
    %c0_23 = arith.constant 0 : index
    %23 = vector.load %arg8[%c0_22, %c0_23] : memref<8x9xf32, #tpu.memory_space<vmem>>, vector<8x9xf32>
    tpu.vector_store %arg8[%c0_22, %c0_23], %22 {strides = array<i32>} : memref<8x9xf32, #tpu.memory_space<vmem>>, vector<8x9xf32>,
    return
  }
  func.func @transform_0(%arg0: i32) -> (i32, i32) {
    %c0_i32 = arith.constant 0 : i32
    %c0_i32_0 = arith.constant 0 : i32
    return %arg0, %c0_i32 : i32, i32
  }
  func.func @transform_1(%arg0: i32) -> (i32, i32) {
    %c0_i32 = arith.constant 0 : i32
    %c0_i32_0 = arith.constant 0 : i32
    %c0_i32_1 = arith.constant 0 : i32
    return %c0_i32, %c0_i32_0 : i32, i32
  }
  func.func @transform_2(%arg0: i32) -> (i32, i32) {
    %c0_i32 = arith.constant 0 : i32
    %c0_i32_0 = arith.constant 0 : i32
    %c0_i32_1 = arith.constant 0 : i32
    return %c0_i32, %c0_i32_0 : i32, i32
  }
  func.func @transform_3(%arg0: i32) -> (i32, i32) {
    %c0_i32 = arith.constant 0 : i32
    %c0_i32_0 = arith.constant 0 : i32
    %c0_i32_1 = arith.constant 0 : i32
    return %c0_i32, %c0_i32_0 : i32, i32
  }
  func.func @transform_4(%arg0: i32) -> (i32, i32) {
    %c0_i32 = arith.constant 0 : i32
    %c0_i32_0 = arith.constant 0 : i32
    %c0_i32_1 = arith.constant 0 : i32
    return %c0_i32, %c0_i32_0 : i32, i32
  }
  func.func @transform_5(%arg0: i32) -> (i32, i32) {
    %c0_i32 = arith.constant 0 : i32
    %c0_i32_0 = arith.constant 0 : i32
    %c0_i32_1 = arith.constant 0 : i32
    return %c0_i32, %c0_i32_0 : i32, i32
  }
  func.func @transform_6(%arg0: i32) -> (i32, i32) {
    %c0_i32 = arith.constant 0 : i32
    %c0_i32_0 = arith.constant 0 : i32
    %c0_i32_1 = arith.constant 0 : i32
    return %c0_i32, %c0_i32_0 : i32, i32
  }
  func.func @transform_7(%arg0: i32) -> (i32, i32) {
    %c0_i32 = arith.constant 0 : i32
    %c0_i32_0 = arith.constant 0 : i32
    return %arg0, %c0_i32 : i32, i32
  }
}

</mosaic_0001>

<llo_original>
// kernel: ttt_forward.1
$region0: #{ttt_forward.1}
  #allocation0 [shape = 'u32[]', space=smem, size = 0x4, offset = 0x4, fixed_abs, tag = 'smem constant byte address 0x4 - core index']
  #allocation1 [shape = 'u32[144,128]{1,0:T(1,128)}', space=vmem, size = 0x12000, scoped, tag = 'internal scratch']
  #allocation2 [shape = 'f32[8,128]{1,0:T(8,128)}', space=vmem, size = 0x1000, scoped, tag = 'scratch operand']
  %s0 = inlined_call_operand.hbm [shape: f32[8,9], index: 0, kind: input, shape index: {}]
  %s1 = inlined_call_operand.hbm [shape: f32[128,256], index: 1, kind: input, shape index: {}]
  %s2 = inlined_call_operand.vmem [shape: f32[1,256], index: 2, kind: input, shape index: {}]
  %s3 = inlined_call_operand.hbm [shape: f32[256,128], index: 3, kind: input, shape index: {}]
  %s4 = inlined_call_operand.vmem [shape: f32[1,128], index: 4, kind: input, shape index: {}]
  %s5 = inlined_call_operand.hbm [shape: f32[128,128], index: 5, kind: input, shape index: {}]
  %s6 = inlined_call_operand.vmem [shape: f32[1,128], index: 6, kind: input, shape index: {}]
  %s7 = inlined_call_operand.hbm [shape: f32[8,9], index: 7, kind: output, shape index: {}]
  %s8 = sld [smem:[#allocation0]]
  $region54: #{ttt_forward.1} parent=0
    _
  %s10 = ssub.s32 1, %s8
  %s11 = scalar_select 0, %s10, %s8
  $region1: #{ttt_forward.1} parent=0
    #allocation3 [shape = 'u8[4096]{0}', space=vmem, size = 0x1000, scoped, tag = 'input window, operand 0, single buffered']
    #allocation4 [shape = 's32[1]{0}', space=sflag, size = 0x4, scoped, tag = 'scoped memory for ttt_forward.1']
    #allocation5 [shape = 's32[1]{0}', space=sflag, size = 0x4, scoped, tag = 'scoped memory for ttt_forward.1']
    #allocation6 [shape = 'u8[131072]{0}', space=vmem, size = 0x20000, scoped, tag = 'input window, operand 1, single buffered']
    #allocation7 [shape = 's32[1]{0}', space=sflag, size = 0x4, scoped, tag = 'scoped memory for ttt_forward.1']
    #allocation8 [shape = 'u8[131072]{0}', space=vmem, size = 0x20000, scoped, tag = 'input window, operand 3, single buffered']
    #allocation9 [shape = 'u8[65536]{0}', space=vmem, size = 0x10000, scoped, tag = 'input window, operand 5, single buffered']
    #allocation10 [shape = 's32[1]{0}', space=sflag, size = 0x4, scoped, tag = 'scoped memory for ttt_forward.1']
    #allocation11 [shape = 'u8[4096]{0}', space=vmem, size = 0x1000, scoped, tag = 'output window, operand 0, single buffered']
    %12 = vsyncpa [#allocation4], 0
    %13 = vsyncpa [#allocation7], 0
    %14 = vsyncpa [#allocation10], 0
    %15 = vsyncpa [#allocation5], 0
    // Predicated region
    $region2: #{ttt_forward.1} parent=1 // pred_check
      _
    $region3: #{ttt_forward.1} parent=1 // pred_check_branch
      %17 = sbr.rel (0) target = $region5
    $region4: #{ttt_forward.1} parent=1 // pred_region
      %s19 = ssub.s32 128, 128
      %20 = vsyncadd [#allocation4], %s19
      %s22 = sshll.u32 [#allocation3], 4
      %s23 = int_to_ptr.vmem [resolvable:$true] %s22
      %25 = dma.hbm_to_vmem [thread:$0]  %s0, 128, %s23, [#allocation4]
    $region5: #{ttt_forward.1} parent=1 // pred_fallthru
      _
    // Predicated region
    $region6: #{ttt_forward.1} parent=1 // pred_check
      _
    $region7: #{ttt_forward.1} parent=1 // pred_check_branch
      %27 = sbr.rel (0) target = $region9
    $region8: #{ttt_forward.1} parent=1 // pred_region
      %s29 = ssub.s32 4096, 4096
      %30 = vsyncadd [#allocation7], %s29
      %s31 = sshll.u32 [#allocation6], 4
      %s32 = int_to_ptr.vmem [resolvable:$true] %s31
      %37 = dma.hbm_to_vmem [thread:$0]  %s1, 4096, %s32, [#allocation7], 256, 256, 16
    $region9: #{ttt_forward.1} parent=1 // pred_fallthru
      _
    // Predicated region
    $region10: #{ttt_forward.1} parent=1 // pred_check
      _
    $region11: #{ttt_forward.1} parent=1 // pred_check_branch
      %39 = sbr.rel (0) target = $region13
    $region12: #{ttt_forward.1} parent=1 // pred_region
      _
    $region13: #{ttt_forward.1} parent=1 // pred_fallthru
      _
    // Predicated region
    $region14: #{ttt_forward.1} parent=1 // pred_check
      _
    $region15: #{ttt_forward.1} parent=1 // pred_check_branch
      %41 = sbr.rel (0) target = $region17
    $region16: #{ttt_forward.1} parent=1 // pred_region
      %s43 = ssub.s32 4096, 4096
      %44 = vsyncadd [#allocation7], %s43
      %s45 = sshll.u32 [#allocation8], 4
      %s46 = int_to_ptr.vmem [resolvable:$true] %s45
      %51 = dma.hbm_to_vmem [thread:$0]  %s3, 4096, %s46, [#allocation7], 128, 128, 8
    $region17: #{ttt_forward.1} parent=1 // pred_fallthru
      _
    // Predicated region
    $region18: #{ttt_forward.1} parent=1 // pred_check
      _
    $region19: #{ttt_forward.1} parent=1 // pred_check_branch
      %53 = sbr.rel (0) target = $region21
    $region20: #{ttt_forward.1} parent=1 // pred_region
      _
    $region21: #{ttt_forward.1} parent=1 // pred_fallthru
      _
    // Predicated region
    $region22: #{ttt_forward.1} parent=1 // pred_check
      _
    $region23: #{ttt_forward.1} parent=1 // pred_check_branch
      %55 = sbr.rel (0) target = $region25
    $region24: #{ttt_forward.1} parent=1 // pred_region
      %s57 = ssub.s32 2048, 2048
      %58 = vsyncadd [#allocation10], %s57
      %s59 = sshll.u32 [#allocation9], 4
      %s60 = int_to_ptr.vmem [resolvable:$true] %s59
      %65 = dma.hbm_to_vmem [thread:$0]  %s5, 2048, %s60, [#allocation10], 128, 128, 8
    $region25: #{ttt_forward.1} parent=1 // pred_fallthru
      _
    // Predicated region
    $region26: #{ttt_forward.1} parent=1 // pred_check
      _
    $region27: #{ttt_forward.1} parent=1 // pred_check_branch
      %67 = sbr.rel (0) target = $region29
    $region28: #{ttt_forward.1} parent=1 // pred_region
      _
    $region29: #{ttt_forward.1} parent=1 // pred_fallthru
      _
    // Predicated region
    $region30: #{ttt_forward.1} parent=1 // pred_check
      _
    $region31: #{ttt_forward.1} parent=1 // pred_check_branch
      %69 = sbr.rel (0) target = $region33
    $region32: #{ttt_forward.1} parent=1 // pred_region
      %70 = dma.done [#allocation4], 128
    $region33: #{ttt_forward.1} parent=1 // pred_fallthru
      _
    // Predicated region
    $region34: #{ttt_forward.1} parent=1 // pred_check
      _
    $region35: #{ttt_forward.1} parent=1 // pred_check_branch
      %72 = sbr.rel (0) target = $region37
    $region36: #{ttt_forward.1} parent=1 // pred_region
      %73 = dma.done [#allocation7], 4096
    $region37: #{ttt_forward.1} parent=1 // pred_fallthru
      _
    // Predicated region
    $region38: #{ttt_forward.1} parent=1 // pred_check
      _
    $region39: #{ttt_forward.1} parent=1 // pred_check_branch
      %75 = sbr.rel (0) target = $region41
    $region40: #{ttt_forward.1} parent=1 // pred_region
      %76 = dma.done [#allocation7], 4096
    $region41: #{ttt_forward.1} parent=1 // pred_fallthru
      _
    // Predicated region
    $region42: #{ttt_forward.1} parent=1 // pred_check
      _
    $region43: #{ttt_forward.1} parent=1 // pred_check_branch
      %78 = sbr.rel (0) target = $region45
    $region44: #{ttt_forward.1} parent=1 // pred_region
      %79 = dma.done [#allocation10], 2048
    $region45: #{ttt_forward.1} parent=1 // pred_fallthru
      _
    %80 = vst [vmem:[#allocation2] sm:$0xff] 0.0
    %v81 = vld [vmem:[#allocation3] sm:$0xff]
    %vm82 = vcmask 72704
    %83 = vst.msk [vmem:[#allocation2] sm:$0xff] %vm82, %v81
    %v84 = vld [vmem:[#allocation2] sm:$0xff]
    %v85 = vld [vmem:[#allocation6] sm:$0xff]
    %v86 = vld [vmem:[#allocation6 + $0x8] sm:$0xff]
    %v87 = vld [vmem:[#allocation6 + $0x10] sm:$0xff]
    %v88 = vld [vmem:[#allocation6 + $0x18] sm:$0xff]
    %v89 = vld [vmem:[#allocation6 + $0x20] sm:$0xff]
    %v90 = vld [vmem:[#allocation6 + $0x28] sm:$0xff]
    %v91 = vld [vmem:[#allocation6 + $0x30] sm:$0xff]
    %v92 = vld [vmem:[#allocation6 + $0x38] sm:$0xff]
    %v93 = vld [vmem:[#allocation6 + $0x40] sm:$0xff]
    %v94 = vld [vmem:[#allocation6 + $0x48] sm:$0xff]
    %v95 = vld [vmem:[#allocation6 + $0x50] sm:$0xff]
    %v96 = vld [vmem:[#allocation6 + $0x58] sm:$0xff]
    %v97 = vld [vmem:[#allocation6 + $0x60] sm:$0xff]
    %v98 = vld [vmem:[#allocation6 + $0x68] sm:$0xff]
    %v99 = vld [vmem:[#allocation6 + $0x70] sm:$0xff]
    %v100 = vld [vmem:[#allocation6 + $0x78] sm:$0xff]
    %v101 = vld [vmem:[#allocation6 + $0x80] sm:$0xff]
    %v102 = vld [vmem:[#allocation6 + $0x88] sm:$0xff]
    %v103 = vld [vmem:[#allocation6 + $0x90] sm:$0xff]
    %v104 = vld [vmem:[#allocation6 + $0x98] sm:$0xff]
    %v105 = vld [vmem:[#allocation6 + $0xa0] sm:$0xff]
    %v106 = vld [vmem:[#allocation6 + $0xa8] sm:$0xff]
    %v107 = vld [vmem:[#allocation6 + $0xb0] sm:$0xff]
    %v108 = vld [vmem:[#allocation6 + $0xb8] sm:$0xff]
    %v109 = vld [vmem:[#allocation6 + $0xc0] sm:$0xff]
    %v110 = vld [vmem:[#allocation6 + $0xc8] sm:$0xff]
    %v111 = vld [vmem:[#allocation6 + $0xd0] sm:$0xff]
    %v112 = vld [vmem:[#allocation6 + $0xd8] sm:$0xff]
    %v113 = vld [vmem:[#allocation6 + $0xe0] sm:$0xff]
    %v114 = vld [vmem:[#allocation6 + $0xe8] sm:$0xff]
    %v115 = vld [vmem:[#allocation6 + $0xf0] sm:$0xff]
    %v116 = vld [vmem:[#allocation6 + $0xf8] sm:$0xff]
    %v117 = vld [vmem:[%s2] sm:$0x3]
    %v119 = vlaneseq
    %v120 = vshrl.u32 %v119, 7
    %v121 = vsub.s32 0, %v120
    %v122 = vrot.slane %v117, %v121
    %v123 = vlaneseq
    %v124 = vshrl.u32 %v123, 7
    %v125 = vsub.s32 1, %v124
    %v126 = vrot.slane %v117, %v125
    %129 = vmatprep.subr.mxu0 %v86
    %130 = vmatpush1.msra.mxu0 %v85
    %131 = vmatprep.subr.mxu0 %v88
    %132 = vmatpush1.msra.mxu0 %v87
    %133 = vmatprep.subr.mxu0 %v90
    %134 = vmatpush1.msra.mxu0 %v89
    %135 = vmatprep.subr.mxu0 %v92
    %136 = vmatpush1.msra.mxu0 %v91
    %137 = vmatprep.subr.mxu0 %v94
    %138 = vmatpush1.msra.mxu0 %v93
    %139 = vmatprep.subr.mxu0 %v96
    %140 = vmatpush1.msra.mxu0 %v95
    %141 = vmatprep.subr.mxu0 %v98
    %142 = vmatpush1.msra.mxu0 %v97
    %143 = vmatprep.subr.mxu0 %v100
    %144 = vmatpush1.msra.mxu0 %v99
    %145 = vmatprep.subr.mxu0 %v102
    %146 = vmatpush1.msra.mxu0 %v101
    %147 = vmatprep.subr.mxu0 %v104
    %148 = vmatpush1.msra.mxu0 %v103
    %149 = vmatprep.subr.mxu0 %v106
    %150 = vmatpush1.msra.mxu0 %v105
    %151 = vmatprep.subr.mxu0 %v108
    %152 = vmatpush1.msra.mxu0 %v107
    %153 = vmatprep.subr.mxu0 %v110
    %154 = vmatpush1.msra.mxu0 %v109
    %155 = vmatprep.subr.mxu0 %v112
    %156 = vmatpush1.msra.mxu0 %v111
    %157 = vmatprep.subr.mxu0 %v114
    %158 = vmatpush1.msra.mxu0 %v113
    %159 = vmatprep.subr.mxu0 %v116
    %160 = vmatpush1.msra.mxu0 %v115
    %161 = vmatprep.subr.mxu0 0.0
    %162 = vmatpush1.msra.mxu0 0.0
    %163 = vmatprep.subr.mxu0 0.0
    %164 = vmatpush1.msra.mxu0 0.0
    %165 = vmatprep.subr.mxu0 0.0
    %166 = vmatpush1.msra.mxu0 0.0
    %167 = vmatprep.subr.mxu0 0.0
    %168 = vmatpush1.msra.mxu0 0.0
    %169 = vmatprep.subr.mxu0 0.0
    %170 = vmatpush1.msra.mxu0 0.0
    %171 = vmatprep.subr.mxu0 0.0
    %172 = vmatpush1.msra.mxu0 0.0
    %173 = vmatprep.subr.mxu0 0.0
    %174 = vmatpush1.msra.mxu0 0.0
    %175 = vmatprep.subr.mxu0 0.0
    %176 = vmatpush1.msra.mxu0 0.0
    %177 = vmatprep.subr.mxu0 0.0
    %178 = vmatpush1.msra.mxu0 0.0
    %179 = vmatprep.subr.mxu0 0.0
    %180 = vmatpush1.msra.mxu0 0.0
    %181 = vmatprep.subr.mxu0 0.0
    %182 = vmatpush1.msra.mxu0 0.0
    %183 = vmatprep.subr.mxu0 0.0
    %184 = vmatpush1.msra.mxu0 0.0
    %185 = vmatprep.subr.mxu0 0.0
    %186 = vmatpush1.msra.mxu0 0.0
    %187 = vmatprep.subr.mxu0 0.0
    %188 = vmatpush1.msra.mxu0 0.0
    %189 = vmatprep.subr.mxu0 0.0
    %190 = vmatpush1.msra.mxu0 0.0
    %191 = vmatprep.subr.mxu0 0.0
    %192 = vmatpush1.msra.mxu0 0.0
    %193 = vmatprep.mubr.f32.mxu0 0.0
    %194 = vmatmul.mubr.f32.gmra.mrb[0].mxu0 %v84
    %v195 = vpop.f32.mrb[0].mxu0
    %v196 = vadd.f32 %v122, %v195
    %v197 = vpop.f32.mrb[0].mxu0
    %v198 = vadd.f32 %v126, %v197
    %199 = vdwg.mxu0
    %v200 = vtanh.pop %v196
    %v201 = vtanh.pop %v198
    %v202 = vld [vmem:[#allocation8] sm:$0xff]
    %v203 = vld [vmem:[#allocation8 + $0x8] sm:$0xff]
    %v204 = vld [vmem:[#allocation8 + $0x10] sm:$0xff]
    %v205 = vld [vmem:[#allocation8 + $0x18] sm:$0xff]
    %v206 = vld [vmem:[#allocation8 + $0x20] sm:$0xff]
    %v207 = vld [vmem:[#allocation8 + $0x28] sm:$0xff]
    %v208 = vld [vmem:[#allocation8 + $0x30] sm:$0xff]
    %v209 = vld [vmem:[#allocation8 + $0x38] sm:$0xff]
    %v210 = vld [vmem:[#allocation8 + $0x40] sm:$0xff]
    %v211 = vld [vmem:[#allocation8 + $0x48] sm:$0xff]
    %v212 = vld [vmem:[#allocation8 + $0x50] sm:$0xff]
    %v213 = vld [vmem:[#allocation8 + $0x58] sm:$0xff]
    %v214 = vld [vmem:[#allocation8 + $0x60] sm:$0xff]
    %v215 = vld [vmem:[#allocation8 + $0x68] sm:$0xff]
    %v216 = vld [vmem:[#allocation8 + $0x70] sm:$0xff]
    %v217 = vld [vmem:[#allocation8 + $0x78] sm:$0xff]
    %v218 = vld [vmem:[#allocation8 + $0x80] sm:$0xff]
    %v219 = vld [vmem:[#allocation8 + $0x88] sm:$0xff]
    %v220 = vld [vmem:[#allocation8 + $0x90] sm:$0xff]
    %v221 = vld [vmem:[#allocation8 + $0x98] sm:$0xff]
    %v222 = vld [vmem:[#allocation8 + $0xa0] sm:$0xff]
    %v223 = vld [vmem:[#allocation8 + $0xa8] sm:$0xff]
    %v224 = vld [vmem:[#allocation8 + $0xb0] sm:$0xff]
    %v225 = vld [vmem:[#allocation8 + $0xb8] sm:$0xff]
    %v226 = vld [vmem:[#allocation8 + $0xc0] sm:$0xff]
    %v227 = vld [vmem:[#allocation8 + $0xc8] sm:$0xff]
    %v228 = vld [vmem:[#allocation8 + $0xd0] sm:$0xff]
    %v229 = vld [vmem:[#allocation8 + $0xd8] sm:$0xff]
    %v230 = vld [vmem:[#allocation8 + $0xe0] sm:$0xff]
    %v231 = vld [vmem:[#allocation8 + $0xe8] sm:$0xff]
    %v232 = vld [vmem:[#allocation8 + $0xf0] sm:$0xff]
    %v233 = vld [vmem:[#allocation8 + $0xf8] sm:$0xff]
    %v234 = vld [vmem:[%s4] sm:$0x1]
    %v236 = vlaneseq
    %v237 = vshrl.u32 %v236, 7
    %v238 = vsub.s32 0, %v237
    %v239 = vrot.slane %v234, %v238
    %241 = vmatprep.subr.mxu0 0.0
    %242 = vmatpush1.msra.mxu0 %v202
    %243 = vmatprep.subr.mxu0 0.0
    %244 = vmatpush1.msra.mxu0 %v203
    %245 = vmatprep.subr.mxu0 0.0
    %246 = vmatpush1.msra.mxu0 %v204
    %247 = vmatprep.subr.mxu0 0.0
    %248 = vmatpush1.msra.mxu0 %v205
    %249 = vmatprep.subr.mxu0 0.0
    %250 = vmatpush1.msra.mxu0 %v206
    %251 = vmatprep.subr.mxu0 0.0
    %252 = vmatpush1.msra.mxu0 %v207
    %253 = vmatprep.subr.mxu0 0.0
    %254 = vmatpush1.msra.mxu0 %v208
    %255 = vmatprep.subr.mxu0 0.0
    %256 = vmatpush1.msra.mxu0 %v209
    %257 = vmatprep.subr.mxu0 0.0
    %258 = vmatpush1.msra.mxu0 %v210
    %259 = vmatprep.subr.mxu0 0.0
    %260 = vmatpush1.msra.mxu0 %v211
    %261 = vmatprep.subr.mxu0 0.0
    %262 = vmatpush1.msra.mxu0 %v212
    %263 = vmatprep.subr.mxu0 0.0
    %264 = vmatpush1.msra.mxu0 %v213
    %265 = vmatprep.subr.mxu0 0.0
    %266 = vmatpush1.msra.mxu0 %v214
    %267 = vmatprep.subr.mxu0 0.0
    %268 = vmatpush1.msra.mxu0 %v215
    %269 = vmatprep.subr.mxu0 0.0
    %270 = vmatpush1.msra.mxu0 %v216
    %271 = vmatprep.subr.mxu0 0.0
    %272 = vmatpush1.msra.mxu0 %v217
    %273 = vmatprep.subr.mxu0 0.0
    %274 = vmatpush1.msra.mxu0 %v218
    %275 = vmatprep.subr.mxu0 0.0
    %276 = vmatpush1.msra.mxu0 %v219
    %277 = vmatprep.subr.mxu0 0.0
    %278 = vmatpush1.msra.mxu0 %v220
    %279 = vmatprep.subr.mxu0 0.0
    %280 = vmatpush1.msra.mxu0 %v221
    %281 = vmatprep.subr.mxu0 0.0
    %282 = vmatpush1.msra.mxu0 %v222
    %283 = vmatprep.subr.mxu0 0.0
    %284 = vmatpush1.msra.mxu0 %v223
    %285 = vmatprep.subr.mxu0 0.0
    %286 = vmatpush1.msra.mxu0 %v224
    %287 = vmatprep.subr.mxu0 0.0
    %288 = vmatpush1.msra.mxu0 %v225
    %289 = vmatprep.subr.mxu0 0.0
    %290 = vmatpush1.msra.mxu0 %v226
    %291 = vmatprep.subr.mxu0 0.0
    %292 = vmatpush1.msra.mxu0 %v227
    %293 = vmatprep.subr.mxu0 0.0
    %294 = vmatpush1.msra.mxu0 %v228
    %295 = vmatprep.subr.mxu0 0.0
    %296 = vmatpush1.msra.mxu0 %v229
    %297 = vmatprep.subr.mxu0 0.0
    %298 = vmatpush1.msra.mxu0 %v230
    %299 = vmatprep.subr.mxu0 0.0
    %300 = vmatpush1.msra.mxu0 %v231
    %301 = vmatprep.subr.mxu0 0.0
    %302 = vmatpush1.msra.mxu0 %v232
    %303 = vmatprep.subr.mxu0 0.0
    %304 = vmatpush1.msra.mxu0 %v233
    %305 = vmatprep.mubr.f32.mxu0 %v201
    %306 = vmatmul.mubr.f32.gmra.mrb[0].mxu0 %v200
    %v307 = vpop.f32.mrb[0].mxu0
    %v308 = vadd.f32 %v239, %v307
    %v309 = vpop.f32.mrb[0].mxu0
    %310 = vdwg.mxu0
    %v311 = vtanh.pop %v308
    %v312 = vld [vmem:[#allocation9] sm:$0xff]
    %v313 = vld [vmem:[#allocation9 + $0x8] sm:$0xff]
    %v314 = vld [vmem:[#allocation9 + $0x10] sm:$0xff]
    %v315 = vld [vmem:[#allocation9 + $0x18] sm:$0xff]
    %v316 = vld [vmem:[#allocation9 + $0x20] sm:$0xff]
    %v317 = vld [vmem:[#allocation9 + $0x28] sm:$0xff]
    %v318 = vld [vmem:[#allocation9 + $0x30] sm:$0xff]
    %v319 = vld [vmem:[#allocation9 + $0x38] sm:$0xff]
    %v320 = vld [vmem:[#allocation9 + $0x40] sm:$0xff]
    %v321 = vld [vmem:[#allocation9 + $0x48] sm:$0xff]
    %v322 = vld [vmem:[#allocation9 + $0x50] sm:$0xff]
    %v323 = vld [vmem:[#allocation9 + $0x58] sm:$0xff]
    %v324 = vld [vmem:[#allocation9 + $0x60] sm:$0xff]
    %v325 = vld [vmem:[#allocation9 + $0x68] sm:$0xff]
    %v326 = vld [vmem:[#allocation9 + $0x70] sm:$0xff]
    %v327 = vld [vmem:[#allocation9 + $0x78] sm:$0xff]
    %v328 = vld [vmem:[%s6] sm:$0x1]
    %v330 = vlaneseq
    %v331 = vshrl.u32 %v330, 7
    %v332 = vsub.s32 0, %v331
    %v333 = vrot.slane %v328, %v332
    %335 = vmatprep.subr.mxu0 0.0
    %336 = vmatpush1.msra.mxu0 %v312
    %337 = vmatprep.subr.mxu0 0.0
    %338 = vmatpush1.msra.mxu0 %v313
    %339 = vmatprep.subr.mxu0 0.0
    %340 = vmatpush1.msra.mxu0 %v314
    %341 = vmatprep.subr.mxu0 0.0
    %342 = vmatpush1.msra.mxu0 %v315
    %343 = vmatprep.subr.mxu0 0.0
    %344 = vmatpush1.msra.mxu0 %v316
    %345 = vmatprep.subr.mxu0 0.0
    %346 = vmatpush1.msra.mxu0 %v317
    %347 = vmatprep.subr.mxu0 0.0
    %348 = vmatpush1.msra.mxu0 %v318
    %349 = vmatprep.subr.mxu0 0.0
    %350 = vmatpush1.msra.mxu0 %v319
    %351 = vmatprep.subr.mxu0 0.0
    %352 = vmatpush1.msra.mxu0 %v320
    %353 = vmatprep.subr.mxu0 0.0
    %354 = vmatpush1.msra.mxu0 %v321
    %355 = vmatprep.subr.mxu0 0.0
    %356 = vmatpush1.msra.mxu0 %v322
    %357 = vmatprep.subr.mxu0 0.0
    %358 = vmatpush1.msra.mxu0 %v323
    %359 = vmatprep.subr.mxu0 0.0
    %360 = vmatpush1.msra.mxu0 %v324
    %361 = vmatprep.subr.mxu0 0.0
    %362 = vmatpush1.msra.mxu0 %v325
    %363 = vmatprep.subr.mxu0 0.0
    %364 = vmatpush1.msra.mxu0 %v326
    %365 = vmatprep.subr.mxu0 0.0
    %366 = vmatpush1.msra.mxu0 %v327
    %367 = vmatprep.subr.mxu0 0.0
    %368 = vmatpush1.msra.mxu0 0.0
    %369 = vmatprep.subr.mxu0 0.0
    %370 = vmatpush1.msra.mxu0 0.0
    %371 = vmatprep.subr.mxu0 0.0
    %372 = vmatpush1.msra.mxu0 0.0
    %373 = vmatprep.subr.mxu0 0.0
    %374 = vmatpush1.msra.mxu0 0.0
    %375 = vmatprep.subr.mxu0 0.0
    %376 = vmatpush1.msra.mxu0 0.0
    %377 = vmatprep.subr.mxu0 0.0
    %378 = vmatpush1.msra.mxu0 0.0
    %379 = vmatprep.subr.mxu0 0.0
    %380 = vmatpush1.msra.mxu0 0.0
    %381 = vmatprep.subr.mxu0 0.0
    %382 = vmatpush1.msra.mxu0 0.0
    %383 = vmatprep.subr.mxu0 0.0
    %384 = vmatpush1.msra.mxu0 0.0
    %385 = vmatprep.subr.mxu0 0.0
    %386 = vmatpush1.msra.mxu0 0.0
    %387 = vmatprep.subr.mxu0 0.0
    %388 = vmatpush1.msra.mxu0 0.0
    %389 = vmatprep.subr.mxu0 0.0
    %390 = vmatpush1.msra.mxu0 0.0
    %391 = vmatprep.subr.mxu0 0.0
    %392 = vmatpush1.msra.mxu0 0.0
    %393 = vmatprep.subr.mxu0 0.0
    %394 = vmatpush1.msra.mxu0 0.0
    %395 = vmatprep.subr.mxu0 0.0
    %396 = vmatpush1.msra.mxu0 0.0
    %397 = vmatprep.subr.mxu0 0.0
    %398 = vmatpush1.msra.mxu0 0.0
    %399 = vmatprep.mubr.f32.mxu0 0.0
    %400 = vmatmul.mubr.f32.gmra.mrb[0].mxu0 %v311
    %v401 = vpop.f32.mrb[0].mxu0
    %v402 = vadd.f32 %v333, %v401
    %v403 = vpop.f32.mrb[0].mxu0
    %404 = vdwg.mxu0
    %405 = vst.msk [vmem:[#allocation11] sm:$0xff] %vm82, %v402
    // Predicated region
    $region46: #{ttt_forward.1} parent=1 // pred_check
      _
    $region47: #{ttt_forward.1} parent=1 // pred_check_branch
      %407 = sbr.rel (0) target = $region49
    $region48: #{ttt_forward.1} parent=1 // pred_region
      %s409 = ssub.s32 128, 128
      %410 = vsyncadd [#allocation5], %s409
      %s412 = sshll.u32 [#allocation11], 4
      %s413 = int_to_ptr.vmem [resolvable:$true] %s412
      %415 = dma.vmem_to_hbm [thread:$0]  %s413, 128, %s7, [#allocation5]
    $region49: #{ttt_forward.1} parent=1 // pred_fallthru
      _
    // Predicated region
    $region50: #{ttt_forward.1} parent=1 // pred_check
      _
    $region51: #{ttt_forward.1} parent=1 // pred_check_branch
      %417 = sbr.rel (0) target = $region53
    $region52: #{ttt_forward.1} parent=1 // pred_region
      %418 = dma.done [#allocation5], 128
    $region53: #{ttt_forward.1} parent=1 // pred_fallthru
      _
    %419 = vsyncpa [#allocation4], 1
    %420 = vsyncpa [#allocation7], 1
    %421 = vsyncpa [#allocation10], 1
    %422 = vsyncpa [#allocation5], 1

</llo_original>
